<compile_context>
chip_gen: v6e
topology: v6e:2x2x1
jax: 0.10.0
libtpu: 0.0.40
codegen_flags: <defaults>
</compile_context>

<pallas_src>
import math
import functools

import jax
import jax.numpy as jnp
from jax.experimental import pallas as pl
from jax.experimental.pallas import tpu as pltpu


def _round_up(x, m):
    return ((x + m - 1) // m) * m


def _rbf_kernel(dist_ref, params_ref, out_ref, *,
                offset, inv_range, soft_cutoff_flag, cutoff_thr_ratio,
                infinite, n_pow):
    # dist_ref:   (1, TN)          distances (lane axis = N)
    # params_ref: (num_basis, 3)   [mean | sqrt(0.5)/std | sigmoid(w)*max_w*sqrt(B)]
    # out_ref:    (num_basis, TN)
    p = params_ref[...]
    mean = p[:, 0:1]                                   # (B, 1)
    inv_std = p[:, 1:2]                                # (B, 1)
    wscale = p[:, 2:3]                                 # (B, 1)

    d = dist_ref[...]                                  # (1, TN)
    dn = (d - offset) * inv_range                      # (1, TN)

    a = (dn - mean) * inv_std                          # (B, TN)
    x = wscale * jnp.exp(-(a * a))                     # one EUP exp per element

    if soft_cutoff_flag:
        thr = cutoff_thr_ratio
        inv_one_minus_thr = 1.0 / (1.0 - thr)
        n = n_pow                                      # python int -> integer_pow

        def _soft_step(u):
            # (u > 0) * ((u < 1) * ((n+1) u^n - n u^(n+1)) + (u >= 1))
            poly = (n + 1) * u ** n - n * u ** (n + 1)
            inner = jnp.where(u < 1.0, poly, 1.0)
            return jnp.where(u > 0.0, inner, 0.0)

        def _soft_cutoff(u):
            u2 = (u - thr) * inv_one_minus_thr
            return 1.0 - _soft_step(u2)

        gt = (dn > 0.5).astype(jnp.float32)            # all (1, TN): negligible
        le = (dn <= 0.5).astype(jnp.float32)
        if infinite:
            cut = _soft_cutoff(dn) * gt + _soft_cutoff(1.0 - dn) * le
        else:
            cut = gt + _soft_cutoff(1.0 - dn) * le
        x = x * cut                                    # (1, TN) broadcasts over B

    out_ref[...] = x.astype(out_ref.dtype)


def gaussian_rbf_finite_cutoff(dist, mean, std_logit, weight_logit, *,
                               cutoff, offset=None, soft_cutoff=True,
                               cutoff_thr_ratio=0.8, infinite=False,
                               max_weight=4.0, block_n=16384,
                               out_dtype=jnp.float32, layout="nb"):
    """dist: (N,) float32.

    layout="nb" -> (N, num_basis), matching the torch module (wrapper-side
                   transpose; this is a second HBM pass over the result).
    layout="bn" -> (num_basis, N), kernel-native orientation, single HBM pass
                   (preferred when the consumer can absorb the orientation).
    """
    assert layout in ("nb", "bn")
    num_basis = mean.shape[-1]
    cutoff = float(cutoff)
    if offset is None:
        offset = 0.01 * cutoff
    offset = float(offset)
    normalizer = math.sqrt(num_basis)
    inv_range = 1.0 / (cutoff - offset)

    dist = jnp.asarray(dist, jnp.float32).reshape(-1)
    N = dist.shape[0]

    # Lane-dense tiling: TN is a multiple of 128.  Large tiles amortize the
    # fixed per-grid-step cost, but keep >= 2 grid steps whenever possible so
    # the "parallel" axis can shard across both v7x TensorCores.
    n128 = _round_up(max(N, 1), 128)
    tile_n = _round_up(min(int(block_n), n128), 128)
    if n128 >= 256:
        tile_n = min(tile_n, _round_up(pl.cdiv(n128, 2), 128))
    tile_n = max(tile_n, 128)
    n_pad = _round_up(N, tile_n)
    if n_pad != N:
        dist = jnp.pad(dist, (0, n_pad - N))
    dist_row = dist.reshape(1, n_pad)

    # Per-basis constants: computed once here on tiny (B,1) arrays, packed into
    # a single resident (B, 3) parameter block (one DMA, one VMEM buffer).
    mean_c = jnp.asarray(mean, jnp.float32).reshape(num_basis, 1)
    std = jax.nn.softplus(
        jnp.asarray(std_logit, jnp.float32).reshape(num_basis, 1)) + 1e-05
    inv_std_c = math.sqrt(0.5) / std
    wscale_c = (jax.nn.sigmoid(
        jnp.asarray(weight_logit, jnp.float32).reshape(num_basis, 1))
        * float(max_weight) * normalizer)
    params = jnp.concatenate([mean_c, inv_std_c, wscale_c], axis=1)  # (B, 3)

    kernel = functools.partial(
        _rbf_kernel,
        offset=offset, inv_range=inv_range,
        soft_cutoff_flag=bool(soft_cutoff),
        cutoff_thr_ratio=float(cutoff_thr_ratio),
        infinite=bool(infinite), n_pow=3)

    out_dtype = jnp.dtype(out_dtype)
    out_elem = out_dtype.itemsize

    # Explicit scoped-VMEM budget so large block_n works on v5e's 16 MiB
    # default (double-buffered output + dist blocks + params + headroom).
    needed = 2 * (num_basis * tile_n * out_elem + tile_n * 4) \
        + num_basis * 3 * 4 + (1 << 20)
    vmem_limit = int(min(max(2 * needed, 16 << 20), 48 << 20))

    # Memory-heavy elementwise kernel: tell XLA so it schedules/overlaps it well.
    n_elems = num_basis * N
    cost = pl.CostEstimate(
        flops=int(6 * n_elems + 14 * N),
        transcendentals=int(n_elems),
        bytes_accessed=int(4 * N + out_elem * n_elems),
    )

    grid = (n_pad // tile_n,)
    out_t = pl.pallas_call(
        kernel,
        out_shape=jax.ShapeDtypeStruct((num_basis, n_pad), out_dtype),
        grid_spec=pltpu.PrefetchScalarGridSpec(
            num_scalar_prefetch=0,
            grid=grid,
            in_specs=[
                pl.BlockSpec((1, tile_n), lambda i: (0, i)),       # lane-dense dist
                pl.BlockSpec((num_basis, 3), lambda i: (0, 0)),    # resident params
            ],
            out_specs=pl.BlockSpec((num_basis, tile_n), lambda i: (0, i)),
        ),
        compiler_params=pltpu.CompilerParams(
            dimension_semantics=("parallel",),
            vmem_limit_bytes=vmem_limit),
        cost_estimate=cost,
    )(dist_row, params)

    if layout == "bn":
        # Kernel-native orientation: no second HBM pass.
        return out_t[:, :N] if n_pad != N else out_t

    # Module semantics: (N, num_basis).  Layout plumbing only (consumers that
    # can absorb the orientation should use layout="bn" instead).
    out = out_t.T
    if n_pad != N:
        out = out[:N]
    return out


def _reference(dist, mean, std_logit, weight_logit, *, cutoff, offset,
               soft_cutoff=True, cutoff_thr_ratio=0.8, infinite=False,
               max_weight=4.0):
    """Pure-JAX reference mirroring the PyTorch forward exactly."""
    num_basis = mean.shape[-1]
    dn = (dist - offset) / (cutoff - offset)
    dn = dn[:, None]
    std = jax.nn.softplus(std_logit) + 1e-05
    x = jnp.exp(-0.5 * ((dn - mean.reshape(1, num_basis)) / std.reshape(1, num_basis)) ** 2)
    x = jax.nn.sigmoid(weight_logit).reshape(1, num_basis) * max_weight * x

    def soft_step(u, n=3):
        return jnp.where(u > 0,
                         jnp.where(u < 1, (n + 1) * u ** n - n * u ** (n + 1), 1.0),
                         0.0)

    def soft_cut(u, thr=cutoff_thr_ratio, n=3):
        u = (u - thr) / (1 - thr)
        return 1 - soft_step(u, n)

    if soft_cutoff:
        if infinite:
            cut = soft_cut(dn) * (dn > 0.5) + soft_cut(1 - dn) * (dn <= 0.5)
        else:
            cut = (dn > 0.5).astype(jnp.float32) + soft_cut(1 - dn) * (dn <= 0.5)
        x = x * cut
    return x * math.sqrt(num_basis)


if __name__ == "__main__":
    key = jax.random.PRNGKey(0)

    # Module hyper-parameters (deterministic init, matching __init__):
    num_basis = 32
    cutoff = 5.0
    offset = 0.01 * cutoff
    init_std = 2.0 / num_basis
    max_weight = 4.0

    mean = jnp.linspace(0.0, 1.0, num_basis + 2)[1:-1].reshape(1, num_basis).astype(jnp.float32)
    std_logit = jnp.full((1, num_basis), math.log(math.exp(init_std) - 1.0),
                         dtype=jnp.float32)
    weight_logit = jnp.full((1, num_basis), -math.log(max_weight / 1.0 - 1.0),
                            dtype=jnp.float32)

    # Example distances: (N,) in [0, cutoff).  N=1024 -> tile_n is capped at 512
    # so the grid has 2 parallel steps (keeps both v7x TensorCores busy).
    N = 1024
    dist = jax.random.uniform(key, (N,), dtype=jnp.float32) * cutoff

    for infinite in (False, True):
        out = gaussian_rbf_finite_cutoff(
            dist, mean, std_logit, weight_logit,
            cutoff=cutoff, offset=offset, soft_cutoff=True,
            cutoff_thr_ratio=0.8, infinite=infinite, max_weight=max_weight)
        out = jax.block_until_ready(out)

        ref = _reference(dist, mean, std_logit, weight_logit,
                         cutoff=cutoff, offset=offset, soft_cutoff=True,
                         cutoff_thr_ratio=0.8, infinite=infinite,
                         max_weight=max_weight)
        assert out.shape == (N, num_basis)
        assert jnp.allclose(out, ref, atol=1e-4, rtol=1e-4), \
            f"mismatch vs reference (infinite={infinite})"

    # Fused-consumer path: kernel-native (num_basis, N) orientation (no wrapper
    # transpose / no second HBM pass) with bf16 cast-on-store.
    out_bn = gaussian_rbf_finite_cutoff(
        dist, mean, std_logit, weight_logit,
        cutoff=cutoff, offset=offset, soft_cutoff=True,
        cutoff_thr_ratio=0.8, infinite=False, max_weight=max_weight,
        layout="bn", out_dtype=jnp.bfloat16)
    out_bn = jax.block_until_ready(out_bn)
    ref = _reference(dist, mean, std_logit, weight_logit,
                     cutoff=cutoff, offset=offset, soft_cutoff=True,
                     cutoff_thr_ratio=0.8, infinite=False,
                     max_weight=max_weight)
    assert out_bn.shape == (num_basis, N)
    assert jnp.allclose(out_bn.astype(jnp.float32), ref.T, atol=0.12, rtol=2e-2), \
        "mismatch vs reference (bn/bf16 path)"

    print("KERNEL_OK")
</pallas_src>

<mosaic_0001>
module attributes {stable_mosaic.version = 11 : i64} {
  func.func @_rbf_kernel(%arg0: i32, %arg1: memref<1x512xf32, #tpu.memory_space<vmem>>, %arg2: memref<32x3xf32, #tpu.memory_space<vmem>>, %arg3: memref<32x512xf32, #tpu.memory_space<vmem>>) attributes {dimension_semantics = [#tpu.dimension_semantics<parallel>], iteration_bounds = array<i64: 2>, scalar_prefetch = 0 : i64, scratch_operands = 0 : i64, tpu.core_type = #tpu.core_type<tc>, window_params = [{transform_indices = @transform_0, window_bounds = array<i64: 1, 512>}, {pipeline_mode = #tpu.pipeline_mode<synchronous>, transform_indices = @transform_1, window_bounds = array<i64: 32, 3>}, {transform_indices = @transform_2, window_bounds = array<i64: 32, 512>}]} {
    %c0 = arith.constant 0 : index
    %c0_0 = arith.constant 0 : index
    %0 = vector.load %arg2[%c0, %c0_0] : memref<32x3xf32, #tpu.memory_space<vmem>>, vector<32x3xf32>
    %1 = vector.extract_strided_slice %0 {offsets = [0, 0], sizes = [32, 1], strides = [1, 1]} : vector<32x3xf32> to vector<32x1xf32>
    %2 = vector.extract_strided_slice %0 {offsets = [0, 1], sizes = [32, 1], strides = [1, 1]} : vector<32x3xf32> to vector<32x1xf32>
    %3 = vector.extract_strided_slice %0 {offsets = [0, 2], sizes = [32, 1], strides = [1, 1]} : vector<32x3xf32> to vector<32x1xf32>
    %c0_1 = arith.constant 0 : index
    %c0_2 = arith.constant 0 : index
    %4 = vector.load %arg1[%c0_1, %c0_2] : memref<1x512xf32, #tpu.memory_space<vmem>>, vector<1x512xf32>
    %cst = arith.constant 5.000000e-02 : f32
    %5 = vector.broadcast %cst : f32 to vector<1x512xf32>
    %6 = arith.subf %4, %5 : vector<1x512xf32>
    %cst_3 = arith.constant 0.202020198 : f32
    %7 = vector.broadcast %cst_3 : f32 to vector<1x512xf32>
    %8 = arith.mulf %6, %7 : vector<1x512xf32>
    %9 = vector.broadcast %8 : vector<1x512xf32> to vector<32x512xf32>
    %10 = vector.broadcast %1 : vector<32x1xf32> to vector<32x512xf32>
    %11 = arith.subf %9, %10 : vector<32x512xf32>
    %12 = vector.broadcast %2 : vector<32x1xf32> to vector<32x512xf32>
    %13 = arith.mulf %11, %12 : vector<32x512xf32>
    %14 = arith.mulf %13, %13 : vector<32x512xf32>
    %cst_4 = arith.constant 0.000000e+00 : f32
    %15 = vector.broadcast %cst_4 : f32 to vector<32x512xf32>
    %16 = arith.subf %15, %14 : vector<32x512xf32>
    %17 = math.exp %16 : vector<32x512xf32>
    %18 = vector.broadcast %3 : vector<32x1xf32> to vector<32x512xf32>
    %19 = arith.mulf %18, %17 : vector<32x512xf32>
    %cst_5 = arith.constant 5.000000e-01 : f32
    %20 = vector.broadcast %cst_5 : f32 to vector<1x512xf32>
    %21 = arith.cmpf ogt, %8, %20 : vector<1x512xf32>
    %22 = arith.extui %21 : vector<1x512xi1> to vector<1x512xi32>
    %23 = arith.sitofp %22 : vector<1x512xi32> to vector<1x512xf32>
    %cst_6 = arith.constant 5.000000e-01 : f32
    %24 = vector.broadcast %cst_6 : f32 to vector<1x512xf32>
    %25 = arith.cmpf ole, %8, %24 : vector<1x512xf32>
    %26 = arith.extui %25 : vector<1x512xi1> to vector<1x512xi32>
    %27 = arith.sitofp %26 : vector<1x512xi32> to vector<1x512xf32>
    %cst_7 = arith.constant 1.000000e+00 : f32
    %28 = vector.broadcast %cst_7 : f32 to vector<1x512xf32>
    %29 = arith.subf %28, %8 : vector<1x512xf32>
    %cst_8 = arith.constant 8.000000e-01 : f32
    %30 = vector.broadcast %cst_8 : f32 to vector<1x512xf32>
    %31 = arith.subf %29, %30 : vector<1x512xf32>
    %cst_9 = arith.constant 5.000000e+00 : f32
    %32 = vector.broadcast %cst_9 : f32 to vector<1x512xf32>
    %33 = arith.mulf %31, %32 : vector<1x512xf32>
    %34 = arith.mulf %33, %33 : vector<1x512xf32>
    %35 = arith.mulf %33, %34 : vector<1x512xf32>
    %cst_10 = arith.constant 4.000000e+00 : f32
    %36 = vector.broadcast %cst_10 : f32 to vector<1x512xf32>
    %37 = arith.mulf %36, %35 : vector<1x512xf32>
    %38 = arith.mulf %33, %33 : vector<1x512xf32>
    %39 = arith.mulf %38, %38 : vector<1x512xf32>
    %cst_11 = arith.constant 3.000000e+00 : f32
    %40 = vector.broadcast %cst_11 : f32 to vector<1x512xf32>
    %41 = arith.mulf %40, %39 : vector<1x512xf32>
    %42 = arith.subf %37, %41 : vector<1x512xf32>
    %cst_12 = arith.constant 1.000000e+00 : f32
    %43 = vector.broadcast %cst_12 : f32 to vector<1x512xf32>
    %44 = arith.cmpf olt, %33, %43 : vector<1x512xf32>
    %cst_13 = arith.constant 1.000000e+00 : f32
    %45 = vector.broadcast %cst_13 : f32 to vector<1x512xf32>
    %46 = arith.select %44, %42, %45 : vector<1x512xi1>, vector<1x512xf32>
    %cst_14 = arith.constant 0.000000e+00 : f32
    %47 = vector.broadcast %cst_14 : f32 to vector<1x512xf32>
    %48 = arith.cmpf ogt, %33, %47 : vector<1x512xf32>
    %cst_15 = arith.constant 0.000000e+00 : f32
    %49 = vector.broadcast %cst_15 : f32 to vector<1x512xf32>
    %50 = arith.select %48, %46, %49 : vector<1x512xi1>, vector<1x512xf32>
    %cst_16 = arith.constant 1.000000e+00 : f32
    %51 = vector.broadcast %cst_16 : f32 to vector<1x512xf32>
    %52 = arith.subf %51, %50 : vector<1x512xf32>
    %53 = arith.mulf %52, %27 : vector<1x512xf32>
    %54 = arith.addf %23, %53 : vector<1x512xf32>
    %55 = vector.broadcast %54 : vector<1x512xf32> to vector<32x512xf32>
    %56 = arith.mulf %19, %55 : vector<32x512xf32>
    %c0_17 = arith.constant 0 : index
    %c0_18 = arith.constant 0 : index
    %57 = vector.load %arg3[%c0_17, %c0_18] : memref<32x512xf32, #tpu.memory_space<vmem>>, vector<32x512xf32>
    tpu.vector_store %arg3[%c0_17, %c0_18], %56 {strides = array<i32>} : memref<32x512xf32, #tpu.memory_space<vmem>>, vector<32x512xf32>,
    return
  }
  func.func @transform_0(%arg0: i32) -> (i32, i32) {
    %c0_i32 = arith.constant 0 : i32
    %c0_i32_0 = arith.constant 0 : i32
    return %c0_i32, %arg0 : i32, i32
  }
  func.func @transform_1(%arg0: i32) -> (i32, i32) {
    %c0_i32 = arith.constant 0 : i32
    %c0_i32_0 = arith.constant 0 : i32
    %c0_i32_1 = arith.constant 0 : i32
    return %c0_i32, %c0_i32_0 : i32, i32
  }
  func.func @transform_2(%arg0: i32) -> (i32, i32) {
    %c0_i32 = arith.constant 0 : i32
    %c0_i32_0 = arith.constant 0 : i32
    return %c0_i32, %arg0 : i32, i32
  }
}

</mosaic_0001>

<llo_original>
// kernel: tpu_custom_call.1
$region0: #{tpu_custom_call.1}
  #allocation0 [shape = 'u32[]', space=smem, size = 0x4, offset = 0x4, fixed_abs, tag = 'smem constant byte address 0x4 - core index']
  #allocation1 [shape = 'u32[144,128]{1,0:T(1,128)}', space=vmem, size = 0x12000, scoped, tag = 'internal scratch']
  %s0 = inlined_call_operand.vmem [shape: f32[1,1024], index: 0, kind: input, shape index: {}]
  %s1 = inlined_call_operand.vmem [shape: f32[32,3], index: 1, kind: input, shape index: {}]
  %s2 = inlined_call_operand.hbm [shape: f32[32,1024], index: 2, kind: output, shape index: {}]
  %s3 = sld [smem:[#allocation0]]
  $region41: #{tpu_custom_call.1} parent=0
    _
  %s5 = ssub.s32 1, %s3
  %s6 = scalar_select 0, %s5, %s3
  $region1: #{tpu_custom_call.1} parent=0
    #allocation2 [shape = 'u8[131072]{0}', space=vmem, size = 0x20000, scoped, tag = 'output window, operand 0']
    #allocation3 [shape = 's32[2]{0}', space=sflag, size = 0x8, scoped, tag = 'scoped memory for tpu_custom_call.1']
    %7 = vsyncpa [#allocation3], 0
    %s8 = scalar_lea.sflag [#allocation3], 1
    %9 = vsyncpa %s8, 0
    loop: start=0, step=1, limit=4
    $region2: #{tpu_custom_call.1} parent=1 // loop_pre_header
      _
    $region3: #{tpu_custom_call.1} parent=1 // loop_header
      %s11 = sphi 0, %s15
      %p12 = scmp.ge.s32.totalorder %s11, 4
      %s21 = sphi 0, %s23
      %s24 = sphi 0, %s21
      %s25 = sphi 0, %s24
      %s41 = sphi 0, %s25
      %s45 = sphi 0, %s45
      %s47 = sphi 0, %s45
      %s48 = sphi 0, %s47
      %s62 = sphi 0, %s48
      %s68 = sphi 0, %s70
      %s71 = sphi 0, %s68
      %s72 = sphi 0, %s71
      %s88 = sphi 0, %s72
    $region4: #{tpu_custom_call.1} parent=1 // loop_header_branch
      %14 = sbr.rel (%p12) target = $region8
    $region5: #{tpu_custom_call.1} parent=1 // loop_body
      %s16 = ssub.s32 %s11, 1
      %s17 = ssub.s32 %s11, 2
      %s18 = sadd.s32 %s11, 1
      %s19 = ssub.s32 %s11, %s18
      %p20 = scmp.eq.s32.totalorder %s19, 0
      %s22 = sadd.s32 %s21, 1
      %s23 = scalar_select %p20, %s21, %s22
      %p26 = pneg %p20
      %p27 = scmp.eq.s32.totalorder %s11, 1
      %p28 = por %p26, %p27
      %p29 = scmp.ne.s32.totalorder %s21, %s24
      %p30 = scmp.eq.s32.totalorder %s11, 0
      %p31 = por %p29, %p30
      %p32 = scmp.ne.s32.totalorder %s21, %s24
      %p33 = scmp.eq.s32.totalorder %s16, 1
      %p34 = por %p32, %p33
      %p35 = scmp.ne.s32.totalorder %s24, %s25
      %p36 = scmp.eq.s32.totalorder %s16, 0
      %p37 = por %p35, %p36
      %p38 = scmp.ne.s32.totalorder %s24, %s25
      %p39 = scmp.eq.s32.totalorder %s17, 1
      %p40 = por %p38, %p39
      %p42 = scmp.ne.s32.totalorder %s25, %s41
      %p43 = scmp.eq.s32.totalorder %s17, 0
      %p44 = por %p42, %p43
      %s46 = sadd.s32 %s45, 1
      %p49 = scmp.eq.s32.totalorder %s11, 1
      %p50 = scmp.ne.s32.totalorder %s45, %s47
      %p51 = scmp.eq.s32.totalorder %s11, 0
      %p52 = por %p50, %p51
      %p53 = scmp.ne.s32.totalorder %s45, %s47
      %p54 = scmp.eq.s32.totalorder %s16, 1
      %p55 = por %p53, %p54
      %p56 = scmp.ne.s32.totalorder %s47, %s48
      %p57 = scmp.eq.s32.totalorder %s16, 0
      %p58 = por %p56, %p57
      %p59 = scmp.ne.s32.totalorder %s47, %s48
      %p60 = scmp.eq.s32.totalorder %s17, 1
      %p61 = por %p59, %p60
      %p63 = scmp.ne.s32.totalorder %s48, %s62
      %p64 = scmp.eq.s32.totalorder %s17, 0
      %p65 = por %p63, %p64
      %s66 = ssub.s32 %s11, %s18
      %p67 = scmp.eq.s32.totalorder %s66, 0
      %s69 = sadd.s32 %s68, 1
      %s70 = scalar_select %p67, %s68, %s69
      %p73 = pneg %p67
      %p74 = scmp.eq.s32.totalorder %s11, 1
      %p75 = por %p73, %p74
      %p76 = scmp.ne.s32.totalorder %s68, %s71
      %p77 = scmp.eq.s32.totalorder %s11, 0
      %p78 = por %p76, %p77
      %p79 = scmp.ne.s32.totalorder %s68, %s71
      %p80 = scmp.eq.s32.totalorder %s16, 1
      %p81 = por %p79, %p80
      %p82 = scmp.ne.s32.totalorder %s71, %s72
      %p83 = scmp.eq.s32.totalorder %s16, 0
      %p84 = por %p82, %p83
      %p85 = scmp.ne.s32.totalorder %s71, %s72
      %p86 = scmp.eq.s32.totalorder %s17, 1
      %p87 = por %p85, %p86
      %p89 = scmp.ne.s32.totalorder %s72, %s88
      %p90 = scmp.eq.s32.totalorder %s17, 0
      %p91 = por %p89, %p90
      %p92 = scmp.le.s32.totalorder 1, %s11
      %p93 = scmp.lt.s32.totalorder %s11, 3
      %p94 = pnand %p92, %p93
      %p95 = pneg %p94
      // Predicated region
      $region9: #{tpu_custom_call.1} parent=5 // pred_check
        _
      $region10: #{tpu_custom_call.1} parent=5 // pred_check_branch
        %97 = sbr.rel (%p94) target = $region12
      $region11: #{tpu_custom_call.1} parent=5 // pred_region
        %s98 = ssub.s32 %s11, 1
        // Predicated region
        $region13: #{tpu_custom_call.1} parent=11 // pred_check
          %p99 = pneg %p58
        $region14: #{tpu_custom_call.1} parent=11 // pred_check_branch
          %101 = sbr.rel (%p99) target = $region16
        $region15: #{tpu_custom_call.1} parent=11 // pred_region
          _
        $region16: #{tpu_custom_call.1} parent=11 // pred_fallthru
          _
      $region12: #{tpu_custom_call.1} parent=5 // pred_fallthru
        _
      %p102 = scmp.lt.s32.totalorder %s11, 2
      // Predicated region
      $region17: #{tpu_custom_call.1} parent=5 // pred_check
        %p103 = pneg %p102
      $region18: #{tpu_custom_call.1} parent=5 // pred_check_branch
        %105 = sbr.rel (%p103) target = $region20
      $region19: #{tpu_custom_call.1} parent=5 // pred_region
        // Predicated region
        $region21: #{tpu_custom_call.1} parent=19 // pred_check
          %p106 = pneg %p31
        $region22: #{tpu_custom_call.1} parent=19 // pred_check_branch
          %108 = sbr.rel (%p106) target = $region24
        $region23: #{tpu_custom_call.1} parent=19 // pred_region
          %s109 = smul.u32 4, %s11
          %p110 = scmp.lt.s32.totalorder %s109, 7
          %s111 = scalar_select %p110, %s109, 7
          %s112 = scalar_lea.vmem %s0, %s111
          %s113 = smul.u32 4, %s11
        $region24: #{tpu_custom_call.1} parent=19 // pred_fallthru
          _
      $region20: #{tpu_custom_call.1} parent=5 // pred_fallthru
        _
      %p114 = scmp.le.s32.totalorder 1, %s11
      %p115 = scmp.lt.s32.totalorder %s11, 3
      %p116 = pnand %p114, %p115
      %p117 = pneg %p116
      // Predicated region
      $region25: #{tpu_custom_call.1} parent=5 // pred_check
        _
      $region26: #{tpu_custom_call.1} parent=5 // pred_check_branch
        %119 = sbr.rel (%p116) target = $region28
      $region27: #{tpu_custom_call.1} parent=5 // pred_region
        %s120 = ssub.s32 %s11, 1
        %s121 = smul.u32 4, %s16
        %p122 = scmp.lt.s32.totalorder %s121, 7
        %s123 = scalar_select %p122, %s121, 7
        %s124 = scalar_lea.vmem %s0, %s123
        %p125 = pneg %p37
        %p126 = pneg %p34
        %p127 = pneg %p58
        %p128 = pneg %p55
        %p129 = pneg %p84
        %p130 = pneg %p81
        %s131 = sand.u32 %s71, 1
        %s132 = scalar_lea.sflag [#allocation3], %s131
        %s133 = sand.u32 %s71, 1
        %s134 = smul.addr %s133, 128
        %s135 = scalar_lea.vmem [#allocation2], %s134
        %s136 = smul.u32 4, %s16
        %p137 = scmp.lt.s32.totalorder %s136, 7
        %s138 = scalar_select %p137, %s136, 7
        %s139 = scalar_lea.vmem %s0, %s138
        %s140 = smul.u32 4, %s16
        %s141 = smul.u32 4, %s16
        %v142 = vld [vmem:[%s1] sm:$0xff]
        %v143 = vld [vmem:[%s1 + $0x8] sm:$0xff]
        %v144 = vld [vmem:[%s1 + $0x10] sm:$0xff]
        %v145 = vld [vmem:[%s1 + $0x18] sm:$0xff]
        %v146 = vld [vmem:[%s139] sm:$0xf]
        %v147 = vsub.f32 %v146, 0.05
        %v148 = vmul.f32 %v147, 0.2020202
        %v150 = vlaneseq
        %v151 = vshrl.u32 %v150, 7
        %v152 = vsub.s32 0, %v151
        %v153 = vrot.slane %v148, %v152
        %v154 = vlaneseq
        %v155 = vshrl.u32 %v154, 7
        %v156 = vsub.s32 1, %v155
        %v157 = vrot.slane %v148, %v156
        %v158 = vlaneseq
        %v159 = vshrl.u32 %v158, 7
        %v160 = vsub.s32 2, %v159
        %v161 = vrot.slane %v148, %v160
        %v162 = vlaneseq
        %v163 = vshrl.u32 %v162, 7
        %v164 = vsub.s32 3, %v163
        %v165 = vrot.slane %v148, %v164
        %171 = vset.pattern.permute.xlu0 0
        %172 = vperm.xlu0 %171, %v142
        %v173 = vpop.permute.xlu0 %172
        %176 = vset.pattern.permute.xlu0 0
        %177 = vperm.xlu0 %176, %v143
        %v178 = vpop.permute.xlu0 %177
        %181 = vset.pattern.permute.xlu0 0
        %182 = vperm.xlu0 %181, %v144
        %v183 = vpop.permute.xlu0 %182
        %186 = vset.pattern.permute.xlu0 0
        %187 = vperm.xlu0 %186, %v145
        %v188 = vpop.permute.xlu0 %187
        %v190 = vsub.f32 %v153, %v173
        %v191 = vsub.f32 %v157, %v173
        %v192 = vsub.f32 %v161, %v173
        %v193 = vsub.f32 %v165, %v173
        %v194 = vsub.f32 %v153, %v178
        %v195 = vsub.f32 %v157, %v178
        %v196 = vsub.f32 %v161, %v178
        %v197 = vsub.f32 %v165, %v178
        %v198 = vsub.f32 %v153, %v183
        %v199 = vsub.f32 %v157, %v183
        %v200 = vsub.f32 %v161, %v183
        %v201 = vsub.f32 %v165, %v183
        %v202 = vsub.f32 %v153, %v188
        %v203 = vsub.f32 %v157, %v188
        %v204 = vsub.f32 %v161, %v188
        %v205 = vsub.f32 %v165, %v188
        %206 = vset.pattern.permute.xlu0 1
        %207 = vperm.xlu0 %206, %v142
        %v208 = vpop.permute.xlu0 %207
        %210 = vset.pattern.permute.xlu0 1
        %211 = vperm.xlu0 %210, %v143
        %v212 = vpop.permute.xlu0 %211
        %214 = vset.pattern.permute.xlu0 1
        %215 = vperm.xlu0 %214, %v144
        %v216 = vpop.permute.xlu0 %215
        %218 = vset.pattern.permute.xlu0 1
        %219 = vperm.xlu0 %218, %v145
        %v220 = vpop.permute.xlu0 %219
        %v222 = vmul.f32 %v190, %v208
        %v223 = vmul.f32 %v191, %v208
        %v224 = vmul.f32 %v192, %v208
        %v225 = vmul.f32 %v193, %v208
        %v226 = vmul.f32 %v194, %v212
        %v227 = vmul.f32 %v195, %v212
        %v228 = vmul.f32 %v196, %v212
        %v229 = vmul.f32 %v197, %v212
        %v230 = vmul.f32 %v198, %v216
        %v231 = vmul.f32 %v199, %v216
        %v232 = vmul.f32 %v200, %v216
        %v233 = vmul.f32 %v201, %v216
        %v234 = vmul.f32 %v202, %v220
        %v235 = vmul.f32 %v203, %v220
        %v236 = vmul.f32 %v204, %v220
        %v237 = vmul.f32 %v205, %v220
        %v238 = vmul.f32 %v222, %v222
        %v239 = vmul.f32 %v223, %v223
        %v240 = vmul.f32 %v224, %v224
        %v241 = vmul.f32 %v225, %v225
        %v242 = vmul.f32 %v226, %v226
        %v243 = vmul.f32 %v227, %v227
        %v244 = vmul.f32 %v228, %v228
        %v245 = vmul.f32 %v229, %v229
        %v246 = vmul.f32 %v230, %v230
        %v247 = vmul.f32 %v231, %v231
        %v248 = vmul.f32 %v232, %v232
        %v249 = vmul.f32 %v233, %v233
        %v250 = vmul.f32 %v234, %v234
        %v251 = vmul.f32 %v235, %v235
        %v252 = vmul.f32 %v236, %v236
        %v253 = vmul.f32 %v237, %v237
        %v254 = vsub.f32 0.0, %v238
        %v255 = vsub.f32 0.0, %v239
        %v256 = vsub.f32 0.0, %v240
        %v257 = vsub.f32 0.0, %v241
        %v258 = vsub.f32 0.0, %v242
        %v259 = vsub.f32 0.0, %v243
        %v260 = vsub.f32 0.0, %v244
        %v261 = vsub.f32 0.0, %v245
        %v262 = vsub.f32 0.0, %v246
        %v263 = vsub.f32 0.0, %v247
        %v264 = vsub.f32 0.0, %v248
        %v265 = vsub.f32 0.0, %v249
        %v266 = vsub.f32 0.0, %v250
        %v267 = vsub.f32 0.0, %v251
        %v268 = vsub.f32 0.0, %v252
        %v269 = vsub.f32 0.0, %v253
        %v270 = vmul.f32 %v254, 1.442695
        %v271 = vpow.pop %v270
        %v272 = vmul.f32 %v255, 1.442695
        %v273 = vpow.pop %v272
        %v274 = vmul.f32 %v256, 1.442695
        %v275 = vpow.pop %v274
        %v276 = vmul.f32 %v257, 1.442695
        %v277 = vpow.pop %v276
        %v278 = vmul.f32 %v258, 1.442695
        %v279 = vpow.pop %v278
        %v280 = vmul.f32 %v259, 1.442695
        %v281 = vpow.pop %v280
        %v282 = vmul.f32 %v260, 1.442695
        %v283 = vpow.pop %v282
        %v284 = vmul.f32 %v261, 1.442695
        %v285 = vpow.pop %v284
        %v286 = vmul.f32 %v262, 1.442695
        %v287 = vpow.pop %v286
        %v288 = vmul.f32 %v263, 1.442695
        %v289 = vpow.pop %v288
        %v290 = vmul.f32 %v264, 1.442695
        %v291 = vpow.pop %v290
        %v292 = vmul.f32 %v265, 1.442695
        %v293 = vpow.pop %v292
        %v294 = vmul.f32 %v266, 1.442695
        %v295 = vpow.pop %v294
        %v296 = vmul.f32 %v267, 1.442695
        %v297 = vpow.pop %v296
        %v298 = vmul.f32 %v268, 1.442695
        %v299 = vpow.pop %v298
        %v300 = vmul.f32 %v269, 1.442695
        %v301 = vpow.pop %v300
        %302 = vset.pattern.permute.xlu0 2
        %303 = vperm.xlu0 %302, %v142
        %v304 = vpop.permute.xlu0 %303
        %306 = vset.pattern.permute.xlu0 2
        %307 = vperm.xlu0 %306, %v143
        %v308 = vpop.permute.xlu0 %307
        %310 = vset.pattern.permute.xlu0 2
        %311 = vperm.xlu0 %310, %v144
        %v312 = vpop.permute.xlu0 %311
        %314 = vset.pattern.permute.xlu0 2
        %315 = vperm.xlu0 %314, %v145
        %v316 = vpop.permute.xlu0 %315
        %v318 = vmul.f32 %v304, %v271
        %v319 = vmul.f32 %v304, %v273
        %v320 = vmul.f32 %v304, %v275
        %v321 = vmul.f32 %v304, %v277
        %v322 = vmul.f32 %v308, %v279
        %v323 = vmul.f32 %v308, %v281
        %v324 = vmul.f32 %v308, %v283
        %v325 = vmul.f32 %v308, %v285
        %v326 = vmul.f32 %v312, %v287
        %v327 = vmul.f32 %v312, %v289
        %v328 = vmul.f32 %v312, %v291
        %v329 = vmul.f32 %v312, %v293
        %v330 = vmul.f32 %v316, %v295
        %v331 = vmul.f32 %v316, %v297
        %v332 = vmul.f32 %v316, %v299
        %v333 = vmul.f32 %v316, %v301
        %vm334 = vcmp.gt.f32.partialorder %v148, 0.5
        %v335 = vsel %vm334, 1, 0
        %v336 = vcvt.s32.f32 %v335
        %vm337 = vcmp.le.f32.partialorder %v148, 0.5
        %v338 = vsel %vm337, 1, 0
        %v339 = vcvt.s32.f32 %v338
        %v340 = vsub.f32 1.0, %v148
        %v341 = vsub.f32 %v340, 0.8
        %v342 = vmul.f32 %v341, 5.0
        %v343 = vmul.f32 %v342, %v342
        %v344 = vmul.f32 %v342, %v343
        %v345 = vmul.f32 %v344, 4.0
        %v346 = vmul.f32 %v343, %v343
        %v347 = vmul.f32 %v346, 3.0
        %v348 = vsub.f32 %v345, %v347
        %vm349 = vcmp.lt.f32.partialorder %v342, 1.0
        %v350 = vsel %vm349, %v348, 1.0
        %vm351 = vcmp.gt.f32.partialorder %v342, 0.0
        %v352 = vsel %vm351, %v350, 0.0
        %v353 = vsub.f32 1.0, %v352
        %v354 = vmul.f32 %v353, %v339
        %v355 = vadd.f32 %v336, %v354
        %v357 = vlaneseq
        %v358 = vshrl.u32 %v357, 7
        %v359 = vsub.s32 0, %v358
        %v360 = vrot.slane %v355, %v359
        %v361 = vlaneseq
        %v362 = vshrl.u32 %v361, 7
        %v363 = vsub.s32 1, %v362
        %v364 = vrot.slane %v355, %v363
        %v365 = vlaneseq
        %v366 = vshrl.u32 %v365, 7
        %v367 = vsub.s32 2, %v366
        %v368 = vrot.slane %v355, %v367
        %v369 = vlaneseq
        %v370 = vshrl.u32 %v369, 7
        %v371 = vsub.s32 3, %v370
        %v372 = vrot.slane %v355, %v371
        %v377 = vmul.f32 %v318, %v360
        %v378 = vmul.f32 %v319, %v364
        %v379 = vmul.f32 %v320, %v368
        %v380 = vmul.f32 %v321, %v372
        %v381 = vmul.f32 %v322, %v360
        %v382 = vmul.f32 %v323, %v364
        %v383 = vmul.f32 %v324, %v368
        %v384 = vmul.f32 %v325, %v372
        %v385 = vmul.f32 %v326, %v360
        %v386 = vmul.f32 %v327, %v364
        %v387 = vmul.f32 %v328, %v368
        %v388 = vmul.f32 %v329, %v372
        %v389 = vmul.f32 %v330, %v360
        %v390 = vmul.f32 %v331, %v364
        %v391 = vmul.f32 %v332, %v368
        %v392 = vmul.f32 %v333, %v372
        %393 = vst [vmem:[%s135] sm:$0xff] %v377
        %394 = vst [vmem:[%s135 + $0x8] sm:$0xff] %v378
        %395 = vst [vmem:[%s135 + $0x10] sm:$0xff] %v379
        %396 = vst [vmem:[%s135 + $0x18] sm:$0xff] %v380
        %397 = vst [vmem:[%s135 + $0x20] sm:$0xff] %v381
        %398 = vst [vmem:[%s135 + $0x28] sm:$0xff] %v382
        %399 = vst [vmem:[%s135 + $0x30] sm:$0xff] %v383
        %400 = vst [vmem:[%s135 + $0x38] sm:$0xff] %v384
        %401 = vst [vmem:[%s135 + $0x40] sm:$0xff] %v385
        %402 = vst [vmem:[%s135 + $0x48] sm:$0xff] %v386
        %403 = vst [vmem:[%s135 + $0x50] sm:$0xff] %v387
        %404 = vst [vmem:[%s135 + $0x58] sm:$0xff] %v388
        %405 = vst [vmem:[%s135 + $0x60] sm:$0xff] %v389
        %406 = vst [vmem:[%s135 + $0x68] sm:$0xff] %v390
        %407 = vst [vmem:[%s135 + $0x70] sm:$0xff] %v391
        %408 = vst [vmem:[%s135 + $0x78] sm:$0xff] %v392
        %s409 = sand.u32 %s71, 1
        %s410 = scalar_lea.sflag [#allocation3], %s409
        %s411 = sand.u32 %s71, 1
        %s412 = smul.addr %s411, 128
        %s413 = scalar_lea.vmem [#allocation2], %s412
        // Predicated region
        $region29: #{tpu_custom_call.1} parent=27 // pred_check
          %p414 = pneg %p81
        $region30: #{tpu_custom_call.1} parent=27 // pred_check_branch
          %416 = sbr.rel (%p414) target = $region32
        $region31: #{tpu_custom_call.1} parent=27 // pred_region
          %s417 = smul.u32 4, %s16
          %s419 = ssub.s32 2048, 2048
          %420 = vsyncadd %s410, %s419
          %s421 = smul.addr %s417, 128
          %s422 = scalar_lea.hbm %s2, %s421
          %s423 = sshll.u32 %s413, 4
          %s424 = int_to_ptr.vmem [resolvable:$true] %s423
          %429 = dma.vmem_to_hbm [thread:$0]  %s424, 2048, %s422, %s410, 512, 1024, 32
        $region32: #{tpu_custom_call.1} parent=27 // pred_fallthru
          _
      $region28: #{tpu_custom_call.1} parent=5 // pred_fallthru
        _
      %p430 = scmp.le.s32.totalorder 2, %s11
      // Predicated region
      $region33: #{tpu_custom_call.1} parent=5 // pred_check
        %p431 = pneg %p430
      $region34: #{tpu_custom_call.1} parent=5 // pred_check_branch
        %433 = sbr.rel (%p431) target = $region36
      $region35: #{tpu_custom_call.1} parent=5 // pred_region
        %s434 = ssub.s32 %s11, 2
        // Predicated region
        $region37: #{tpu_custom_call.1} parent=35 // pred_check
          %p435 = pneg %p87
        $region38: #{tpu_custom_call.1} parent=35 // pred_check_branch
          %437 = sbr.rel (%p435) target = $region40
        $region39: #{tpu_custom_call.1} parent=35 // pred_region
          %s438 = sand.u32 %s72, 1
          %s439 = scalar_lea.sflag [#allocation3], %s438
          %s440 = sand.u32 %s72, 1
          %s441 = smul.addr %s440, 128
          %s442 = scalar_lea.vmem [#allocation2], %s441
          %443 = dma.done %s439, 2048
        $region40: #{tpu_custom_call.1} parent=35 // pred_fallthru
          _
      $region36: #{tpu_custom_call.1} parent=5 // pred_fallthru
        _
    $region6: #{tpu_custom_call.1} parent=1 // loop_footer
      %s15 = sadd.s32 1, %s11
    $region7: #{tpu_custom_call.1} parent=1 // loop_footer_branch
      %10 = sbr.rel target = $region3
    $region8: #{tpu_custom_call.1} parent=1 // loop_exit
      _
    %444 = vsyncpa [#allocation3], 1
    %s445 = scalar_lea.sflag [#allocation3], 1
    %446 = vsyncpa %s445, 1

</llo_original>
